<compile_context>
chip_gen: v6e
topology: v6e:2x2x1
jax: 0.10.0
libtpu: 0.0.40
codegen_flags: <defaults>
</compile_context>

<pallas_src>
import functools

import jax
import jax.numpy as jnp
from jax import lax
from jax.experimental import pallas as pl
from jax.experimental.pallas import tpu as pltpu


def _round_up(x: int, m: int) -> int:
    return ((x + m - 1) // m) * m


def _rbm_gibbs_kernel(v_ref, w_ref, vb_ref, hb_ref, uh_ref, uv_ref, out_ref,
                      *, mcmc_steps):
    """Full Gibbs chain for one batch tile.

    v_ref : (TB, Vp)      f32   observed visible tile
    w_ref : (Vp, Hp)      bf16  weights (resident across the grid)
    vb_ref: (1, Vp)       f32   visible bias
    hb_ref: (1, Hp)       f32   hidden bias
    uh_ref: (S+1, TB, Hp) f32   uniforms for the hidden Bernoulli draws
    uv_ref: (S,   TB, Vp) f32   uniforms for the visible Bernoulli draws
    """
    w = w_ref[...]            # loaded once, reused every Gibbs step
    vb = vb_ref[...]
    hb = hb_ref[...]

    def sample_hidden(v, u):
        # h_logits = v @ W + h_bias   (contract over the V axis of W)
        logits = lax.dot_general(
            v.astype(jnp.bfloat16), w,
            dimension_numbers=(((1,), (0,)), ((), ())),
            preferred_element_type=jnp.float32) + hb
        return (u < jax.nn.sigmoid(logits)).astype(jnp.float32)

    def sample_visible(h, u):
        # v_logits = h @ W.T + v_bias (contract over the H axis of W;
        # W.T is never materialized).
        logits = lax.dot_general(
            h.astype(jnp.bfloat16), w,
            dimension_numbers=(((1,), (1,)), ((), ())),
            preferred_element_type=jnp.float32) + vb
        return (u < jax.nn.sigmoid(logits)).astype(jnp.float32)

    v0 = v_ref[...]
    h0 = sample_hidden(v0, uh_ref[0])

    def body(step, carry):
        _, h = carry
        v_s = sample_visible(h, uv_ref[step])
        h = sample_hidden(v_s, uh_ref[step + 1])
        return (v_s, h)

    v_s, _ = lax.fori_loop(0, mcmc_steps, body, (v0, h0))
    out_ref[...] = v_s.astype(out_ref.dtype)


def rbm_forward(observed_visible, weights, visible_bias, hidden_bias, key,
                mcmc_steps=10):
    """Forward pass of the binary RBM. Returns (observed_visible, sampled_visible)."""
    B, V = observed_visible.shape
    Vw, H = weights.shape
    assert Vw == V, "weights must have shape (n_visible, n_hidden)"

    steps = max(int(mcmc_steps), 1)          # matches the reference forward()

    # Lane padding (last dim -> multiple of 128); batch tile & sublane padding.
    Vp = _round_up(V, 128)
    Hp = _round_up(H, 128)
    TB = 128 if B > 128 else _round_up(B, 8)
    Bp = _round_up(B, TB)

    f32 = jnp.float32
    v_p = jnp.zeros((Bp, Vp), f32).at[:B, :V].set(observed_visible.astype(f32))
    w_p = jnp.zeros((Vp, Hp), jnp.bfloat16).at[:V, :H].set(
        weights.astype(jnp.bfloat16))
    vb_p = jnp.zeros((1, Vp), f32).at[:, :V].set(
        visible_bias.reshape(1, V).astype(f32))
    hb_p = jnp.zeros((1, Hp), f32).at[:, :H].set(
        hidden_bias.reshape(1, H).astype(f32))

    # Precomputed uniforms for every Bernoulli draw of the chain.
    k_h, k_v = jax.random.split(key)
    u_h = jax.random.uniform(k_h, (steps + 1, Bp, Hp), dtype=f32)
    u_v = jax.random.uniform(k_v, (steps, Bp, Vp), dtype=f32)

    grid = (Bp // TB,)

    n_h, n_v = steps + 1, steps
    cost = pl.CostEstimate(
        flops=2 * Bp * Vp * Hp * (n_h + n_v),
        transcendentals=Bp * (n_h * Hp + n_v * Vp),
        bytes_accessed=(2 * Bp * Vp * 4 + Vp * Hp * 2
                        + (n_h * Bp * Hp + n_v * Bp * Vp) * 4
                        + (Vp + Hp) * 4),
    )

    kernel = functools.partial(_rbm_gibbs_kernel, mcmc_steps=steps)

    sampled_p = pl.pallas_call(
        kernel,
        out_shape=jax.ShapeDtypeStruct((Bp, Vp), f32),
        grid=grid,
        in_specs=[
            pl.BlockSpec((TB, Vp), lambda i: (i, 0)),            # visible tile
            pl.BlockSpec((Vp, Hp), lambda i: (0, 0)),            # weights (resident)
            pl.BlockSpec((1, Vp), lambda i: (0, 0)),             # visible bias
            pl.BlockSpec((1, Hp), lambda i: (0, 0)),             # hidden bias
            pl.BlockSpec((steps + 1, TB, Hp), lambda i: (0, i, 0)),  # hidden uniforms
            pl.BlockSpec((steps, TB, Vp), lambda i: (0, i, 0)),      # visible uniforms
        ],
        out_specs=pl.BlockSpec((TB, Vp), lambda i: (i, 0)),
        compiler_params=pltpu.CompilerParams(
            dimension_semantics=("parallel",),
            vmem_limit_bytes=48 * 1024 * 1024,
        ),
        cost_estimate=cost,
    )(v_p, w_p, vb_p, hb_p, u_h, u_v)

    return observed_visible, sampled_p[:B, :V]


if __name__ == "__main__":
    # Small, TPU-friendly sizes consistent with the module's forward:
    # batch=8 observations over n_visible=128 nodes, n_hidden=64.
    B, n_visible, n_hidden = 8, 128, 64
    mcmc_steps = 10

    key = jax.random.PRNGKey(0)
    k_w, k_v, k_sample = jax.random.split(key, 3)

    # Deterministic parameter init, mirroring the module's __init__:
    #   weights = randn(n_visible, n_hidden) * 0.01 ; biases = zeros
    weights = jax.random.normal(k_w, (n_visible, n_hidden), dtype=jnp.float32) * 0.01
    visible_bias = jnp.zeros((n_visible,), dtype=jnp.float32)
    hidden_bias = jnp.zeros((n_hidden,), dtype=jnp.float32)

    # Observed visible activations in [0, 1) (as in the module's `test` method).
    observed_visible = jax.random.uniform(k_v, (B, n_visible), dtype=jnp.float32)

    obs_out, sampled_visible = rbm_forward(
        observed_visible, weights, visible_bias, hidden_bias,
        key=k_sample, mcmc_steps=mcmc_steps,
    )
    jax.block_until_ready(sampled_visible)

    # Basic sanity: samples are binary and shapes match.
    assert obs_out.shape == (B, n_visible)
    assert sampled_visible.shape == (B, n_visible)
    assert bool(jnp.all((sampled_visible == 0.0) | (sampled_visible == 1.0)))

    print("KERNEL_OK")
</pallas_src>

<mosaic_0001>
module attributes {stable_mosaic.version = 11 : i64} {
  func.func @_rbm_gibbs_kernel(%arg0: i32, %arg1: memref<8x128xf32, #tpu.memory_space<vmem>>, %arg2: memref<128x128xbf16, #tpu.memory_space<vmem>>, %arg3: memref<1x128xf32, #tpu.memory_space<vmem>>, %arg4: memref<1x128xf32, #tpu.memory_space<vmem>>, %arg5: memref<11x8x128xf32, #tpu.memory_space<vmem>>, %arg6: memref<10x8x128xf32, #tpu.memory_space<vmem>>, %arg7: memref<8x128xf32, #tpu.memory_space<vmem>>) attributes {dimension_semantics = [#tpu.dimension_semantics<parallel>], iteration_bounds = array<i64: 1>, scalar_prefetch = 0 : i64, scratch_operands = 0 : i64, tpu.core_type = #tpu.core_type<tc>, window_params = [{transform_indices = @transform_0, window_bounds = array<i64: 8, 128>}, {pipeline_mode = #tpu.pipeline_mode<synchronous>, transform_indices = @transform_1, window_bounds = array<i64: 128, 128>}, {pipeline_mode = #tpu.pipeline_mode<synchronous>, transform_indices = @transform_2, window_bounds = array<i64: 1, 128>}, {pipeline_mode = #tpu.pipeline_mode<synchronous>, transform_indices = @transform_3, window_bounds = array<i64: 1, 128>}, {transform_indices = @transform_4, window_bounds = array<i64: 11, 8, 128>}, {transform_indices = @transform_5, window_bounds = array<i64: 10, 8, 128>}, {transform_indices = @transform_6, window_bounds = array<i64: 8, 128>}]} {
    %c0 = arith.constant 0 : index
    %c0_0 = arith.constant 0 : index
    %0 = vector.load %arg2[%c0, %c0_0] : memref<128x128xbf16, #tpu.memory_space<vmem>>, vector<128x128xbf16>
    %c0_1 = arith.constant 0 : index
    %c0_2 = arith.constant 0 : index
    %1 = vector.load %arg3[%c0_1, %c0_2] : memref<1x128xf32, #tpu.memory_space<vmem>>, vector<1x128xf32>
    %c0_3 = arith.constant 0 : index
    %c0_4 = arith.constant 0 : index
    %2 = vector.load %arg4[%c0_3, %c0_4] : memref<1x128xf32, #tpu.memory_space<vmem>>, vector<1x128xf32>
    %c0_5 = arith.constant 0 : index
    %c0_6 = arith.constant 0 : index
    %3 = vector.load %arg1[%c0_5, %c0_6] : memref<8x128xf32, #tpu.memory_space<vmem>>, vector<8x128xf32>
    %c0_7 = arith.constant 0 : index
    %c0_8 = arith.constant 0 : index
    %c0_9 = arith.constant 0 : index
    %4 = vector.load %arg5[%c0_7, %c0_8, %c0_9] : memref<11x8x128xf32, #tpu.memory_space<vmem>>, vector<1x8x128xf32>
    %5 = vector.shape_cast %4 : vector<1x8x128xf32> to vector<8x128xf32>
    %6 = arith.truncf %3 : vector<8x128xf32> to vector<8x128xbf16>
    %cst = arith.constant dense<0.000000e+00> : vector<8x128xf32>
    %7 = tpu.matmul %6, %0, %cst {dimension_numbers = #tpu.dot_dimension_numbers<[1], [0], [0], [1], [0, 0, 1, 1], [], []>} : vector<8x128xbf16>, vector<128x128xbf16>, vector<8x128xf32> -> vector<8x128xf32>
    %8 = vector.broadcast %2 : vector<1x128xf32> to vector<8x128xf32>
    %9 = arith.addf %7, %8 : vector<8x128xf32>
    %10 = arith.negf %9 : vector<8x128xf32>
    %11 = math.exp %10 : vector<8x128xf32>
    %cst_10 = arith.constant 1.000000e+00 : f32
    %12 = vector.broadcast %cst_10 : f32 to vector<8x128xf32>
    %13 = arith.addf %12, %11 : vector<8x128xf32>
    %14 = arith.divf %12, %13 : vector<8x128xf32>
    %15 = arith.cmpf olt, %5, %14 : vector<8x128xf32>
    %16 = arith.extui %15 : vector<8x128xi1> to vector<8x128xi32>
    %17 = arith.sitofp %16 : vector<8x128xi32> to vector<8x128xf32>
    %c0_i32 = arith.constant 0 : i32
    %c10_i32 = arith.constant 10 : i32
    %18 = arith.addi %c0_i32, %c10_i32 : i32
    %c1_i32 = arith.constant 1 : i32
    %19:2 = scf.for %arg8 = %c0_i32 to %18 step %c1_i32 iter_args(%arg9 = %3, %arg10 = %17) -> (vector<8x128xf32>, vector<8x128xf32>)  : i32 {
      %21 = arith.index_cast %arg8 : i32 to index
      %c0_14 = arith.constant 0 : index
      %c0_15 = arith.constant 0 : index
      %22 = vector.load %arg6[%21, %c0_14, %c0_15] : memref<10x8x128xf32, #tpu.memory_space<vmem>>, vector<1x8x128xf32>
      %23 = vector.shape_cast %22 : vector<1x8x128xf32> to vector<8x128xf32>
      %24 = arith.truncf %arg10 : vector<8x128xf32> to vector<8x128xbf16>
      %cst_16 = arith.constant dense<0.000000e+00> : vector<8x128xf32>
      %25 = tpu.matmul %24, %0, %cst_16 {dimension_numbers = #tpu.dot_dimension_numbers<[1], [1], [0], [0], [0, 0, 1, 0], [], []>} : vector<8x128xbf16>, vector<128x128xbf16>, vector<8x128xf32> -> vector<8x128xf32>
      %26 = vector.broadcast %1 : vector<1x128xf32> to vector<8x128xf32>
      %27 = arith.addf %25, %26 : vector<8x128xf32>
      %28 = arith.negf %27 : vector<8x128xf32>
      %29 = math.exp %28 : vector<8x128xf32>
      %cst_17 = arith.constant 1.000000e+00 : f32
      %30 = vector.broadcast %cst_17 : f32 to vector<8x128xf32>
      %31 = arith.addf %30, %29 : vector<8x128xf32>
      %32 = arith.divf %30, %31 : vector<8x128xf32>
      %33 = arith.cmpf olt, %23, %32 : vector<8x128xf32>
      %34 = arith.extui %33 : vector<8x128xi1> to vector<8x128xi32>
      %35 = arith.sitofp %34 : vector<8x128xi32> to vector<8x128xf32>
      %c1_i32_18 = arith.constant 1 : i32
      %36 = arith.addi %arg8, %c1_i32_18 : i32
      %37 = arith.index_cast %36 : i32 to index
      %c0_19 = arith.constant 0 : index
      %c0_20 = arith.constant 0 : index
      %38 = vector.load %arg5[%37, %c0_19, %c0_20] : memref<11x8x128xf32, #tpu.memory_space<vmem>>, vector<1x8x128xf32>
      %39 = vector.shape_cast %38 : vector<1x8x128xf32> to vector<8x128xf32>
      %40 = arith.truncf %35 : vector<8x128xf32> to vector<8x128xbf16>
      %cst_21 = arith.constant dense<0.000000e+00> : vector<8x128xf32>
      %41 = tpu.matmul %40, %0, %cst_21 {dimension_numbers = #tpu.dot_dimension_numbers<[1], [0], [0], [1], [0, 0, 1, 1], [], []>} : vector<8x128xbf16>, vector<128x128xbf16>, vector<8x128xf32> -> vector<8x128xf32>
      %42 = vector.broadcast %2 : vector<1x128xf32> to vector<8x128xf32>
      %43 = arith.addf %41, %42 : vector<8x128xf32>
      %44 = arith.negf %43 : vector<8x128xf32>
      %45 = math.exp %44 : vector<8x128xf32>
      %cst_22 = arith.constant 1.000000e+00 : f32
      %46 = vector.broadcast %cst_22 : f32 to vector<8x128xf32>
      %47 = arith.addf %46, %45 : vector<8x128xf32>
      %48 = arith.divf %46, %47 : vector<8x128xf32>
      %49 = arith.cmpf olt, %39, %48 : vector<8x128xf32>
      %50 = arith.extui %49 : vector<8x128xi1> to vector<8x128xi32>
      %51 = arith.sitofp %50 : vector<8x128xi32> to vector<8x128xf32>
      scf.yield %35, %51 : vector<8x128xf32>, vector<8x128xf32>
    }
    %c10_i32_11 = arith.constant 10 : i32
    %c0_12 = arith.constant 0 : index
    %c0_13 = arith.constant 0 : index
    %20 = vector.load %arg7[%c0_12, %c0_13] : memref<8x128xf32, #tpu.memory_space<vmem>>, vector<8x128xf32>
    tpu.vector_store %arg7[%c0_12, %c0_13], %19#0 {strides = array<i32>} : memref<8x128xf32, #tpu.memory_space<vmem>>, vector<8x128xf32>,
    return
  }
  func.func @transform_0(%arg0: i32) -> (i32, i32) {
    %c0_i32 = arith.constant 0 : i32
    %c0_i32_0 = arith.constant 0 : i32
    return %arg0, %c0_i32 : i32, i32
  }
  func.func @transform_1(%arg0: i32) -> (i32, i32) {
    %c0_i32 = arith.constant 0 : i32
    %c0_i32_0 = arith.constant 0 : i32
    %c0_i32_1 = arith.constant 0 : i32
    return %c0_i32, %c0_i32_0 : i32, i32
  }
  func.func @transform_2(%arg0: i32) -> (i32, i32) {
    %c0_i32 = arith.constant 0 : i32
    %c0_i32_0 = arith.constant 0 : i32
    %c0_i32_1 = arith.constant 0 : i32
    return %c0_i32, %c0_i32_0 : i32, i32
  }
  func.func @transform_3(%arg0: i32) -> (i32, i32) {
    %c0_i32 = arith.constant 0 : i32
    %c0_i32_0 = arith.constant 0 : i32
    %c0_i32_1 = arith.constant 0 : i32
    return %c0_i32, %c0_i32_0 : i32, i32
  }
  func.func @transform_4(%arg0: i32) -> (i32, i32, i32) {
    %c0_i32 = arith.constant 0 : i32
    %c0_i32_0 = arith.constant 0 : i32
    %c0_i32_1 = arith.constant 0 : i32
    return %c0_i32, %arg0, %c0_i32_0 : i32, i32, i32
  }
  func.func @transform_5(%arg0: i32) -> (i32, i32, i32) {
    %c0_i32 = arith.constant 0 : i32
    %c0_i32_0 = arith.constant 0 : i32
    %c0_i32_1 = arith.constant 0 : i32
    return %c0_i32, %arg0, %c0_i32_0 : i32, i32, i32
  }
  func.func @transform_6(%arg0: i32) -> (i32, i32) {
    %c0_i32 = arith.constant 0 : i32
    %c0_i32_0 = arith.constant 0 : i32
    return %arg0, %c0_i32 : i32, i32
  }
}

</mosaic_0001>

<llo_original>
// kernel: tpu_custom_call.1
$region0: #{tpu_custom_call.1}
  #allocation0 [shape = 'u32[]', space=smem, size = 0x4, offset = 0x4, fixed_abs, tag = 'smem constant byte address 0x4 - core index']
  #allocation1 [shape = 'u32[144,128]{1,0:T(1,128)}', space=vmem, size = 0x12000, scoped, tag = 'internal scratch']
  %s0 = inlined_call_operand.hbm [shape: f32[8,128], index: 0, kind: input, shape index: {}]
  %s1 = inlined_call_operand.hbm [shape: bf16[128,128], index: 1, kind: input, shape index: {}]
  %s2 = inlined_call_operand.vmem [shape: f32[1,128], index: 2, kind: input, shape index: {}]
  %s3 = inlined_call_operand.vmem [shape: f32[1,128], index: 3, kind: input, shape index: {}]
  %s4 = inlined_call_operand.hbm [shape: f32[11,8,128], index: 4, kind: input, shape index: {}]
  %s5 = inlined_call_operand.hbm [shape: f32[10,8,128], index: 5, kind: input, shape index: {}]
  %s6 = inlined_call_operand.hbm [shape: f32[8,128], index: 6, kind: output, shape index: {}]
  %s7 = sld [smem:[#allocation0]]
  $region57: #{tpu_custom_call.1} parent=0
    _
  %s9 = ssub.s32 1, %s7
  %s10 = scalar_select 0, %s9, %s7
  $region1: #{tpu_custom_call.1} parent=0
    #allocation2 [shape = 'u8[4096]{0}', space=vmem, size = 0x1000, scoped, tag = 'input window, operand 0, single buffered']
    #allocation3 [shape = 's32[1]{0}', space=sflag, size = 0x4, scoped, tag = 'scoped memory for tpu_custom_call.1']
    #allocation4 [shape = 's32[1]{0}', space=sflag, size = 0x4, scoped, tag = 'scoped memory for tpu_custom_call.1']
    #allocation5 [shape = 'u8[32768]{0}', space=vmem, size = 0x8000, scoped, tag = 'input window, operand 1, single buffered']
    #allocation6 [shape = 's32[1]{0}', space=sflag, size = 0x4, scoped, tag = 'scoped memory for tpu_custom_call.1']
    #allocation7 [shape = 'u8[45056]{0}', space=vmem, size = 0xb000, scoped, tag = 'input window, operand 4, single buffered']
    #allocation8 [shape = 'u8[40960]{0}', space=vmem, size = 0xa000, scoped, tag = 'input window, operand 5, single buffered']
    #allocation9 [shape = 's32[1]{0}', space=sflag, size = 0x4, scoped, tag = 'scoped memory for tpu_custom_call.1']
    #allocation10 [shape = 'u8[4096]{0}', space=vmem, size = 0x1000, scoped, tag = 'output window, operand 0, single buffered']
    %11 = vsyncpa [#allocation3], 0
    %12 = vsyncpa [#allocation6], 0
    %13 = vsyncpa [#allocation9], 0
    %14 = vsyncpa [#allocation4], 0
    // Predicated region
    $region2: #{tpu_custom_call.1} parent=1 // pred_check
      _
    $region3: #{tpu_custom_call.1} parent=1 // pred_check_branch
      %16 = sbr.rel (0) target = $region5
    $region4: #{tpu_custom_call.1} parent=1 // pred_region
      %s18 = ssub.s32 128, 128
      %19 = vsyncadd [#allocation3], %s18
      %s21 = sshll.u32 [#allocation2], 4
      %s22 = int_to_ptr.vmem [resolvable:$true] %s21
      %24 = dma.hbm_to_vmem [thread:$0]  %s0, 128, %s22, [#allocation3]
    $region5: #{tpu_custom_call.1} parent=1 // pred_fallthru
      _
    // Predicated region
    $region6: #{tpu_custom_call.1} parent=1 // pred_check
      _
    $region7: #{tpu_custom_call.1} parent=1 // pred_check_branch
      %26 = sbr.rel (0) target = $region9
    $region8: #{tpu_custom_call.1} parent=1 // pred_region
      %s28 = ssub.s32 1024, 1024
      %29 = vsyncadd [#allocation6], %s28
      %s30 = sshll.u32 [#allocation5], 4
      %s31 = int_to_ptr.vmem [resolvable:$true] %s30
      %36 = dma.hbm_to_vmem [thread:$0]  %s1, 1024, %s31, [#allocation6], 64, 64, 4
    $region9: #{tpu_custom_call.1} parent=1 // pred_fallthru
      _
    // Predicated region
    $region10: #{tpu_custom_call.1} parent=1 // pred_check
      _
    $region11: #{tpu_custom_call.1} parent=1 // pred_check_branch
      %38 = sbr.rel (0) target = $region13
    $region12: #{tpu_custom_call.1} parent=1 // pred_region
      _
    $region13: #{tpu_custom_call.1} parent=1 // pred_fallthru
      _
    // Predicated region
    $region14: #{tpu_custom_call.1} parent=1 // pred_check
      _
    $region15: #{tpu_custom_call.1} parent=1 // pred_check_branch
      %40 = sbr.rel (0) target = $region17
    $region16: #{tpu_custom_call.1} parent=1 // pred_region
      _
    $region17: #{tpu_custom_call.1} parent=1 // pred_fallthru
      _
    // Predicated region
    $region18: #{tpu_custom_call.1} parent=1 // pred_check
      _
    $region19: #{tpu_custom_call.1} parent=1 // pred_check_branch
      %42 = sbr.rel (0) target = $region21
    $region20: #{tpu_custom_call.1} parent=1 // pred_region
      %s44 = ssub.s32 1408, 1408
      %45 = vsyncadd [#allocation6], %s44
      %s46 = sshll.u32 [#allocation7], 4
      %s47 = int_to_ptr.vmem [resolvable:$true] %s46
      %52 = dma.hbm_to_vmem [thread:$0]  %s4, 1408, %s47, [#allocation6], 128, 128, 8
    $region21: #{tpu_custom_call.1} parent=1 // pred_fallthru
      _
    // Predicated region
    $region22: #{tpu_custom_call.1} parent=1 // pred_check
      _
    $region23: #{tpu_custom_call.1} parent=1 // pred_check_branch
      %54 = sbr.rel (0) target = $region25
    $region24: #{tpu_custom_call.1} parent=1 // pred_region
      %s56 = ssub.s32 1280, 1280
      %57 = vsyncadd [#allocation9], %s56
      %s58 = sshll.u32 [#allocation8], 4
      %s59 = int_to_ptr.vmem [resolvable:$true] %s58
      %64 = dma.hbm_to_vmem [thread:$0]  %s5, 1280, %s59, [#allocation9], 128, 128, 8
    $region25: #{tpu_custom_call.1} parent=1 // pred_fallthru
      _
    // Predicated region
    $region26: #{tpu_custom_call.1} parent=1 // pred_check
      _
    $region27: #{tpu_custom_call.1} parent=1 // pred_check_branch
      %66 = sbr.rel (0) target = $region29
    $region28: #{tpu_custom_call.1} parent=1 // pred_region
      %67 = dma.done [#allocation3], 128
    $region29: #{tpu_custom_call.1} parent=1 // pred_fallthru
      _
    // Predicated region
    $region30: #{tpu_custom_call.1} parent=1 // pred_check
      _
    $region31: #{tpu_custom_call.1} parent=1 // pred_check_branch
      %69 = sbr.rel (0) target = $region33
    $region32: #{tpu_custom_call.1} parent=1 // pred_region
      %70 = dma.done [#allocation6], 1024
    $region33: #{tpu_custom_call.1} parent=1 // pred_fallthru
      _
    // Predicated region
    $region34: #{tpu_custom_call.1} parent=1 // pred_check
      _
    $region35: #{tpu_custom_call.1} parent=1 // pred_check_branch
      %72 = sbr.rel (0) target = $region37
    $region36: #{tpu_custom_call.1} parent=1 // pred_region
      %73 = dma.done [#allocation6], 1408
    $region37: #{tpu_custom_call.1} parent=1 // pred_fallthru
      _
    // Predicated region
    $region38: #{tpu_custom_call.1} parent=1 // pred_check
      _
    $region39: #{tpu_custom_call.1} parent=1 // pred_check_branch
      %75 = sbr.rel (0) target = $region41
    $region40: #{tpu_custom_call.1} parent=1 // pred_region
      %76 = dma.done [#allocation9], 1280
    $region41: #{tpu_custom_call.1} parent=1 // pred_fallthru
      _
    %v78 = vld [vmem:[#allocation5] sm:$0xf]
    %v79 = vld [vmem:[#allocation5 + $0x4] sm:$0xf]
    %v80 = vld [vmem:[#allocation5 + $0x8] sm:$0xf]
    %v81 = vld [vmem:[#allocation5 + $0xc] sm:$0xf]
    %v82 = vld [vmem:[#allocation5 + $0x10] sm:$0xf]
    %v83 = vld [vmem:[#allocation5 + $0x14] sm:$0xf]
    %v84 = vld [vmem:[#allocation5 + $0x18] sm:$0xf]
    %v85 = vld [vmem:[#allocation5 + $0x1c] sm:$0xf]
    %v86 = vld [vmem:[#allocation5 + $0x20] sm:$0xf]
    %v87 = vld [vmem:[#allocation5 + $0x24] sm:$0xf]
    %v88 = vld [vmem:[#allocation5 + $0x28] sm:$0xf]
    %v89 = vld [vmem:[#allocation5 + $0x2c] sm:$0xf]
    %v90 = vld [vmem:[#allocation5 + $0x30] sm:$0xf]
    %v91 = vld [vmem:[#allocation5 + $0x34] sm:$0xf]
    %v92 = vld [vmem:[#allocation5 + $0x38] sm:$0xf]
    %v93 = vld [vmem:[#allocation5 + $0x3c] sm:$0xf]
    %v94 = vld [vmem:[%s2] sm:$0x1]
    %v95 = vld [vmem:[%s3] sm:$0x1]
    %v96 = vld [vmem:[#allocation2] sm:$0xff]
    %v97 = vld [vmem:[#allocation7] sm:$0xff]
    %v98 = vpack.c.bf16 %v96, %v96
    %v100 = vlaneseq
    %v101 = vshrl.u32 %v100, 7
    %v102 = vsub.s32 0, %v101
    %v103 = vrot.slane %v95, %v102
    %v121 = vunpack.c.l.b16 %v78
    %v122 = vunpack.c.l.b16 %v79
    %v123 = vunpack.c.l.b16 %v80
    %v124 = vunpack.c.l.b16 %v81
    %v125 = vunpack.c.l.b16 %v82
    %v126 = vunpack.c.l.b16 %v83
    %v127 = vunpack.c.l.b16 %v84
    %v128 = vunpack.c.l.b16 %v85
    %v129 = vunpack.c.l.b16 %v86
    %v130 = vunpack.c.l.b16 %v87
    %v131 = vunpack.c.l.b16 %v88
    %v132 = vunpack.c.l.b16 %v89
    %v133 = vunpack.c.l.b16 %v90
    %v134 = vunpack.c.l.b16 %v91
    %v135 = vunpack.c.l.b16 %v92
    %v136 = vunpack.c.l.b16 %v93
    %v137 = vpack.c.b16 %v122, %v121
    %v138 = vpack.c.b16 %v124, %v123
    %v139 = vpack.c.b16 %v126, %v125
    %v140 = vpack.c.b16 %v128, %v127
    %v141 = vpack.c.b16 %v130, %v129
    %v142 = vpack.c.b16 %v132, %v131
    %v143 = vpack.c.b16 %v134, %v133
    %v144 = vpack.c.b16 %v136, %v135
    %153 = vmatprep.subr.bf16.mxu0 0
    %154 = vmatpush1.bf16.msra.mxu0 %v144
    %155 = vmatprep.subr.bf16.mxu0 0
    %156 = vmatpush1.bf16.msra.mxu0 %v143
    %157 = vmatprep.subr.bf16.mxu0 0
    %158 = vmatpush1.bf16.msra.mxu0 %v142
    %159 = vmatprep.subr.bf16.mxu0 0
    %160 = vmatpush1.bf16.msra.mxu0 %v141
    %161 = vmatprep.subr.bf16.mxu0 0
    %162 = vmatpush1.bf16.msra.mxu0 %v140
    %163 = vmatprep.subr.bf16.mxu0 0
    %164 = vmatpush1.bf16.msra.mxu0 %v139
    %165 = vmatprep.subr.bf16.mxu0 0
    %166 = vmatpush1.bf16.msra.mxu0 %v138
    %167 = vmatprep.subr.bf16.mxu0 0
    %168 = vmatpush1.bf16.msra.mxu0 %v137
    %169 = vmatprep.subr.bf16.mxu0 0
    %170 = vmatpush2.bf16.msra.mxu0 0
    %171 = vmatprep.subr.bf16.mxu0 0
    %172 = vmatpush2.bf16.msra.mxu0 0
    %173 = vmatprep.subr.bf16.mxu0 0
    %174 = vmatpush2.bf16.msra.mxu0 0
    %175 = vmatprep.subr.bf16.mxu0 0
    %176 = vmatpush2.bf16.msra.mxu0 0
    %177 = vmatprep.subr.bf16.mxu0 0
    %178 = vmatpush2.bf16.msra.mxu0 0
    %179 = vmatprep.subr.bf16.mxu0 0
    %180 = vmatpush2.bf16.msra.mxu0 0
    %181 = vmatprep.subr.bf16.mxu0 0
    %182 = vmatpush2.bf16.msra.mxu0 0
    %183 = vmatprep.subr.bf16.mxu0 0
    %184 = vmatpush2.bf16.msra.mxu0 0
    %185 = vmatprep.mubr.bf16.mxu0 0
    %186 = vmatmul.mubr.bf16.gmra.mxu0 %v98
    %v187 = vpop.f32.mrf.mxu0
    %v188 = vadd.f32 %v103, %v187
    %v189 = vpop.f32.mrf.mxu0
    %v190 = vpop.f32.mrf.mxu0
    %v191 = vpop.f32.mrf.mxu0
    %192 = vdwg.mxu0
    %v193 = vxor.u32 %v188, 2147483648
    %v194 = vmul.f32 %v193, 1.442695
    %v195 = vpow.pop %v194
    %v196 = vadd.f32 %v195, 1.0
    %v197 = vrcp.pop %v196
    %v198 = vmul.f32 1.0, %v197
    %vm199 = vcmp.lt.f32.partialorder %v97, %v198
    %v200 = vsel %vm199, 1, 0
    %v201 = vcvt.s32.f32 %v200
    loop: start=0, step=1, limit=10
    $region42: #{tpu_custom_call.1} parent=1 // loop_pre_header
      _
    $region43: #{tpu_custom_call.1} parent=1 // loop_header
      %s203 = sphi 0, %s207
      %p204 = scmp.ge.s32.totalorder %s203, 10
      %v208 = vphi %v96, %v268
      %v209 = vphi %v201, %v322
    $region44: #{tpu_custom_call.1} parent=1 // loop_header_branch
      %206 = sbr.rel (%p204) target = $region48
    $region45: #{tpu_custom_call.1} parent=1 // loop_body
      %s210 = smul.u32 %s203, 8
      %s211 = scalar_lea.vmem [#allocation8], %s210
      %v212 = vld [vmem:[%s211] sm:$0xff]
      %v213 = vpack.c.bf16 %v209, %v209
      %v215 = vlaneseq
      %v216 = vshrl.u32 %v215, 7
      %v217 = vsub.s32 0, %v216
      %v218 = vrot.slane %v94, %v217
      %220 = vmatprep.subr.bf16.mxu0 0
      %221 = vmatpush1.bf16.xpose.msra.mxu0 %v144
      %222 = vmatprep.subr.bf16.mxu0 0
      %223 = vmatpush1.bf16.xpose.msra.mxu0 %v143
      %224 = vmatprep.subr.bf16.mxu0 0
      %225 = vmatpush1.bf16.xpose.msra.mxu0 %v142
      %226 = vmatprep.subr.bf16.mxu0 0
      %227 = vmatpush1.bf16.xpose.msra.mxu0 %v141
      %228 = vmatprep.subr.bf16.mxu0 0
      %229 = vmatpush1.bf16.xpose.msra.mxu0 %v140
      %230 = vmatprep.subr.bf16.mxu0 0
      %231 = vmatpush1.bf16.xpose.msra.mxu0 %v139
      %232 = vmatprep.subr.bf16.mxu0 0
      %233 = vmatpush1.bf16.xpose.msra.mxu0 %v138
      %234 = vmatprep.subr.bf16.mxu0 0
      %235 = vmatpush1.bf16.xpose.msra.mxu0 %v137
      %236 = vmatprep.subr.bf16.mxu0 0
      %237 = vmatpush2.bf16.xpose.msra.mxu0 0
      %238 = vmatprep.subr.bf16.mxu0 0
      %239 = vmatpush2.bf16.xpose.msra.mxu0 0
      %240 = vmatprep.subr.bf16.mxu0 0
      %241 = vmatpush2.bf16.xpose.msra.mxu0 0
      %242 = vmatprep.subr.bf16.mxu0 0
      %243 = vmatpush2.bf16.xpose.msra.mxu0 0
      %244 = vmatprep.subr.bf16.mxu0 0
      %245 = vmatpush2.bf16.xpose.msra.mxu0 0
      %246 = vmatprep.subr.bf16.mxu0 0
      %247 = vmatpush2.bf16.xpose.msra.mxu0 0
      %248 = vmatprep.subr.bf16.mxu0 0
      %249 = vmatpush2.bf16.xpose.msra.mxu0 0
      %250 = vmatprep.subr.bf16.mxu0 0
      %251 = vmatpush2.bf16.xpose.msra.mxu0 0
      %252 = vmatprep.mubr.bf16.mxu0 0
      %253 = vmatmul.mubr.bf16.gmra.mxu0 %v213
      %v254 = vpop.f32.mrf.mxu0
      %v255 = vadd.f32 %v218, %v254
      %v256 = vpop.f32.mrf.mxu0
      %v257 = vpop.f32.mrf.mxu0
      %v258 = vpop.f32.mrf.mxu0
      %259 = vdwg.mxu0
      %v260 = vxor.u32 %v255, 2147483648
      %v261 = vmul.f32 %v260, 1.442695
      %v262 = vpow.pop %v261
      %v263 = vadd.f32 %v262, 1.0
      %v264 = vrcp.pop %v263
      %v265 = vmul.f32 1.0, %v264
      %vm266 = vcmp.lt.f32.partialorder %v212, %v265
      %v267 = vsel %vm266, 1, 0
      %v268 = vcvt.s32.f32 %v267
      %s269 = sadd.s32 %s203, 1
      %s270 = smul.u32 %s269, 8
      %s271 = scalar_lea.vmem [#allocation7], %s270
      %v272 = vld [vmem:[%s271] sm:$0xff]
      %v273 = vpack.c.bf16 %v268, %v268
      %274 = vmatprep.subr.bf16.mxu0 0
      %275 = vmatpush1.bf16.msra.mxu0 %v144
      %276 = vmatprep.subr.bf16.mxu0 0
      %277 = vmatpush1.bf16.msra.mxu0 %v143
      %278 = vmatprep.subr.bf16.mxu0 0
      %279 = vmatpush1.bf16.msra.mxu0 %v142
      %280 = vmatprep.subr.bf16.mxu0 0
      %281 = vmatpush1.bf16.msra.mxu0 %v141
      %282 = vmatprep.subr.bf16.mxu0 0
      %283 = vmatpush1.bf16.msra.mxu0 %v140
      %284 = vmatprep.subr.bf16.mxu0 0
      %285 = vmatpush1.bf16.msra.mxu0 %v139
      %286 = vmatprep.subr.bf16.mxu0 0
      %287 = vmatpush1.bf16.msra.mxu0 %v138
      %288 = vmatprep.subr.bf16.mxu0 0
      %289 = vmatpush1.bf16.msra.mxu0 %v137
      %290 = vmatprep.subr.bf16.mxu0 0
      %291 = vmatpush2.bf16.msra.mxu0 0
      %292 = vmatprep.subr.bf16.mxu0 0
      %293 = vmatpush2.bf16.msra.mxu0 0
      %294 = vmatprep.subr.bf16.mxu0 0
      %295 = vmatpush2.bf16.msra.mxu0 0
      %296 = vmatprep.subr.bf16.mxu0 0
      %297 = vmatpush2.bf16.msra.mxu0 0
      %298 = vmatprep.subr.bf16.mxu0 0
      %299 = vmatpush2.bf16.msra.mxu0 0
      %300 = vmatprep.subr.bf16.mxu0 0
      %301 = vmatpush2.bf16.msra.mxu0 0
      %302 = vmatprep.subr.bf16.mxu0 0
      %303 = vmatpush2.bf16.msra.mxu0 0
      %304 = vmatprep.subr.bf16.mxu0 0
      %305 = vmatpush2.bf16.msra.mxu0 0
      %306 = vmatprep.mubr.bf16.mxu0 0
      %307 = vmatmul.mubr.bf16.gmra.mxu0 %v273
      %v308 = vpop.f32.mrf.mxu0
      %v309 = vadd.f32 %v103, %v308
      %v310 = vpop.f32.mrf.mxu0
      %v311 = vpop.f32.mrf.mxu0
      %v312 = vpop.f32.mrf.mxu0
      %313 = vdwg.mxu0
      %v314 = vxor.u32 %v309, 2147483648
      %v315 = vmul.f32 %v314, 1.442695
      %v316 = vpow.pop %v315
      %v317 = vadd.f32 %v316, 1.0
      %v318 = vrcp.pop %v317
      %v319 = vmul.f32 1.0, %v318
      %vm320 = vcmp.lt.f32.partialorder %v272, %v319
      %v321 = vsel %vm320, 1, 0
      %v322 = vcvt.s32.f32 %v321
    $region46: #{tpu_custom_call.1} parent=1 // loop_footer
      %s207 = sadd.s32 1, %s203
    $region47: #{tpu_custom_call.1} parent=1 // loop_footer_branch
      %202 = sbr.rel target = $region43
    $region48: #{tpu_custom_call.1} parent=1 // loop_exit
      _
    %323 = vst [vmem:[#allocation10] sm:$0xff] %v208
    // Predicated region
    $region49: #{tpu_custom_call.1} parent=1 // pred_check
      _
    $region50: #{tpu_custom_call.1} parent=1 // pred_check_branch
      %325 = sbr.rel (0) target = $region52
    $region51: #{tpu_custom_call.1} parent=1 // pred_region
      %s327 = ssub.s32 128, 128
      %328 = vsyncadd [#allocation4], %s327
      %s330 = sshll.u32 [#allocation10], 4
      %s331 = int_to_ptr.vmem [resolvable:$true] %s330
      %333 = dma.vmem_to_hbm [thread:$0]  %s331, 128, %s6, [#allocation4]
    $region52: #{tpu_custom_call.1} parent=1 // pred_fallthru
      _
    // Predicated region
    $region53: #{tpu_custom_call.1} parent=1 // pred_check
      _
    $region54: #{tpu_custom_call.1} parent=1 // pred_check_branch
      %335 = sbr.rel (0) target = $region56
    $region55: #{tpu_custom_call.1} parent=1 // pred_region
      %336 = dma.done [#allocation4], 128
    $region56: #{tpu_custom_call.1} parent=1 // pred_fallthru
      _
    %337 = vsyncpa [#allocation3], 1
    %338 = vsyncpa [#allocation6], 1
    %339 = vsyncpa [#allocation9], 1
    %340 = vsyncpa [#allocation4], 1

</llo_original>
